<compile_context>
chip_gen: v5e
topology: v5e:2x2
jax: 0.10.0
libtpu: 0.0.40
codegen_flags: <defaults>
</compile_context>

<pallas_src>
import functools

import jax
import jax.numpy as jnp
from jax import lax
from jax.experimental import pallas as pl
from jax.experimental.pallas import tpu as pltpu


def _softmax_weights(d, mask):
    # fastreid softmax_weights: masked, max-shifted softmax along axis=1.
    max_v = jnp.max(d * mask, axis=1, keepdims=True)
    e = jnp.exp(d - max_v) * mask          # single EUP pass, reused for num & denom
    z = jnp.sum(e, axis=1, keepdims=True) + 1e-6
    return e / z


def _weighted_mining(dist, is_pos, is_neg):
    posf = is_pos.astype(jnp.float32)
    negf = is_neg.astype(jnp.float32)
    d_ap = dist * posf
    d_an = dist * negf
    w_ap = _softmax_weights(d_ap, posf)
    w_an = _softmax_weights(-d_an, negf)
    dist_ap = jnp.sum(d_ap * w_ap, axis=1, keepdims=True)
    dist_an = jnp.sum(d_an * w_an, axis=1, keepdims=True)
    return dist_ap, dist_an


def _triplet_kernel(emb_blk_ref, emb_all_ref, tcol_ref, trow_ref, out_ref, *,
                    margin, hard_mining, norm_feat):
    x_blk = emb_blk_ref[...].astype(jnp.float32)       # (TM, Dp) anchor rows
    x_all = emb_all_ref[...].astype(jnp.float32)       # (Np, Dp) all rows
    tcol = tcol_ref[...]                               # (TM, 1) int32, -1 = pad
    trow = trow_ref[...]                               # (1, Np) int32, -1 = pad

    same = tcol == trow                                 # (TM, Np)
    col_valid = trow >= 0                               # (1, Np)
    is_pos = jnp.logical_and(same, col_valid)
    is_neg = jnp.logical_and(jnp.logical_not(same), col_valid)

    if norm_feat:
        # F.normalize(x, p=2, dim=1): x * rsqrt(max(|x|^2, 1e-24))
        xn_blk = x_blk * lax.rsqrt(
            jnp.maximum(jnp.sum(x_blk * x_blk, axis=1, keepdims=True), 1e-24))
        xn_all = x_all * lax.rsqrt(
            jnp.maximum(jnp.sum(x_all * x_all, axis=1, keepdims=True), 1e-24))
        # bf16 inputs, f32 accumulation on the MXU.
        gram = lax.dot_general(
            xn_blk.astype(jnp.bfloat16), xn_all.astype(jnp.bfloat16),
            (((1,), (1,)), ((), ())),
            preferred_element_type=jnp.float32)          # (TM, Np)

        if hard_mining:
            # cosine_dist = 2 - 2*gram is monotone decreasing in gram, so:
            #   max_pos(dist) = 2 - 2*min_pos(gram); min_neg(dist) = 2 - 2*max_neg(gram)
            # Selects feed the XLU reduction directly; gram is in [-1, 1].
            min_pos = jnp.min(jnp.where(is_pos, gram, 2.0), axis=1, keepdims=True)
            max_neg = jnp.max(jnp.where(is_neg, gram, -2.0), axis=1, keepdims=True)
            dist_ap = 2.0 - 2.0 * min_pos
            dist_an = 2.0 - 2.0 * max_neg
        else:
            dist = 2.0 - 2.0 * gram
            dist_ap, dist_an = _weighted_mining(dist, is_pos, is_neg)
    else:
        # euclidean_dist: sqrt(clamp(|xi|^2 + |xj|^2 - 2 xi.xj, min=1e-12))
        gram = lax.dot_general(
            x_blk.astype(jnp.bfloat16), x_all.astype(jnp.bfloat16),
            (((1,), (1,)), ((), ())),
            preferred_element_type=jnp.float32)
        sq_blk = jnp.sum(x_blk * x_blk, axis=1, keepdims=True)       # (TM, 1)
        ones = jnp.ones((1, x_all.shape[1]), jnp.float32)
        sq_all = lax.dot_general(ones, x_all * x_all,
                                 (((1,), (1,)), ((), ())),
                                 preferred_element_type=jnp.float32)  # (1, Np)
        dist = jnp.sqrt(jnp.maximum(sq_blk + sq_all - 2.0 * gram, 1e-12))
        if hard_mining:
            dist_ap = jnp.max(jnp.where(is_pos, dist, -1.0), axis=1, keepdims=True)
            dist_an = jnp.min(jnp.where(is_neg, dist, 1e30), axis=1, keepdims=True)
        else:
            dist_ap, dist_an = _weighted_mining(dist, is_pos, is_neg)

    if margin > 0.0:
        # F.margin_ranking_loss(dist_an, dist_ap, y=1, margin), mean reduction:
        #   mean(max(0, dist_ap - dist_an + margin))
        per_anchor = jnp.maximum(dist_ap - dist_an + margin, 0.0)
    else:
        # F.soft_margin_loss(dist_an - dist_ap, y=1) == softplus(dist_ap - dist_an),
        # computed in a numerically stable form.
        # TODO(synk): torch's host-side re-run with margin=0.3 when loss==inf is a
        # dynamic python branch; not reproduced here (the stable form never infs).
        z = dist_ap - dist_an
        per_anchor = jnp.maximum(z, 0.0) + jnp.log1p(jnp.exp(-jnp.abs(z)))

    # Padded anchor rows contribute nothing to the loss.
    out_ref[...] = jnp.where(tcol >= 0, per_anchor, 0.0)


def _round_up(v, m):
    return ((v + m - 1) // m) * m


def triplet_loss_pallas(embedding, targets, *,
                        margin=0.3, hard_mining=True, norm_feat=True):
    n, d = embedding.shape
    dp = _round_up(d, 128)                 # lane-dense feature dim
    n8 = _round_up(n, 8)
    if n8 <= 256:
        tm, np_ = n8, n8                   # single block
    else:
        tm = 256                           # row tile; bounds VMEM to ~TM x Np
        np_ = _round_up(n, tm)
    num_blocks = np_ // tm

    # Zero-pad features/rows; padded rows get target -1 (never matches real IDs).
    emb_p = jnp.zeros((np_, dp), embedding.dtype).at[:n, :d].set(embedding)
    t_p = jnp.full((np_,), -1, dtype=jnp.int32).at[:n].set(targets.astype(jnp.int32))
    tcol = t_p.reshape(np_, 1)
    trow = t_p.reshape(1, np_)

    kernel = functools.partial(
        _triplet_kernel,
        margin=float(margin),
        hard_mining=bool(hard_mining),
        norm_feat=bool(norm_feat),
    )

    itemsize = jnp.dtype(embedding.dtype).itemsize
    cost = pl.CostEstimate(
        flops=2 * np_ * np_ * dp + 8 * np_ * np_,
        transcendentals=np_ * (num_blocks + 1),
        bytes_accessed=(num_blocks + 1) * np_ * dp * itemsize + 3 * np_ * 4 + np_ * 4,
    )

    per_anchor = pl.pallas_call(
        kernel,
        out_shape=jax.ShapeDtypeStruct((np_, 1), jnp.float32),
        grid=(num_blocks,),
        in_specs=[
            pl.BlockSpec((tm, dp), lambda i: (i, 0)),    # anchor row block
            pl.BlockSpec((np_, dp), lambda i: (0, 0)),   # full matrix, resident
            pl.BlockSpec((tm, 1), lambda i: (i, 0)),     # targets column block
            pl.BlockSpec((1, np_), lambda i: (0, 0)),    # targets row view
        ],
        out_specs=pl.BlockSpec((tm, 1), lambda i: (i, 0)),
        compiler_params=pltpu.CompilerParams(
            dimension_semantics=("parallel",),
            vmem_limit_bytes=64 * 1024 * 1024,
        ),
        cost_estimate=cost,
    )(emb_p, emb_p, tcol, trow)

    # Mean over the true (unpadded) batch; padded rows wrote exact zeros.
    return jnp.sum(per_anchor[:, 0]) / n


def _triplet_loss_ref(embedding, targets, *, margin=0.3):
    # Plain-JAX f32 reference mirroring the torch code (cosine + hard mining).
    x = embedding.astype(jnp.float32)
    xn = x / jnp.maximum(jnp.linalg.norm(x, axis=1, keepdims=True), 1e-12)
    dist = 2.0 - 2.0 * (xn @ xn.T)
    is_pos = targets[:, None] == targets[None, :]
    dist_ap = jnp.max(jnp.where(is_pos, dist, -jnp.inf), axis=1)
    dist_an = jnp.min(jnp.where(is_pos, jnp.inf, dist), axis=1)
    return jnp.mean(jnp.maximum(dist_ap - dist_an + margin, 0.0))


if __name__ == "__main__":
    key = jax.random.PRNGKey(0)
    k1, k2 = jax.random.split(key)

    # Case 1: the canonical small shape.
    n, d = 8, 32
    emb1 = jax.random.normal(k1, (n, d), dtype=jnp.float32)
    tgt1 = jnp.array([0, 0, 1, 1, 2, 2, 3, 3], dtype=jnp.int32)
    loss1 = jax.block_until_ready(
        triplet_loss_pallas(emb1, tgt1, margin=0.3, hard_mining=True, norm_feat=True))
    ref1 = _triplet_loss_ref(emb1, tgt1, margin=0.3)
    # bf16 Gram (f32 accumulation) introduces <~1e-2 absolute deviation vs f32 torch.
    assert jnp.allclose(loss1, ref1, atol=5e-2), (loss1, ref1)

    # Case 2: exercises row (12->16) and feature (48->128) padding paths.
    n2, d2 = 12, 48
    emb2 = jax.random.normal(k2, (n2, d2), dtype=jnp.float32)
    tgt2 = jnp.array([0, 0, 0, 1, 1, 1, 2, 2, 2, 3, 3, 3], dtype=jnp.int32)
    loss2 = jax.block_until_ready(
        triplet_loss_pallas(emb2, tgt2, margin=0.3, hard_mining=True, norm_feat=True))
    ref2 = _triplet_loss_ref(emb2, tgt2, margin=0.3)
    assert jnp.allclose(loss2, ref2, atol=5e-2), (loss2, ref2)

    print("KERNEL_OK")
</pallas_src>

<mosaic_0001>
module attributes {stable_mosaic.version = 11 : i64} {
  func.func @_triplet_kernel(%arg0: i32, %arg1: memref<8x128xf32, #tpu.memory_space<vmem>>, %arg2: memref<8x128xf32, #tpu.memory_space<vmem>>, %arg3: memref<8x1xi32, #tpu.memory_space<vmem>>, %arg4: memref<1x8xi32, #tpu.memory_space<vmem>>, %arg5: memref<8x1xf32, #tpu.memory_space<vmem>>) attributes {dimension_semantics = [#tpu.dimension_semantics<parallel>], iteration_bounds = array<i64: 1>, scalar_prefetch = 0 : i64, scratch_operands = 0 : i64, tpu.core_type = #tpu.core_type<tc>, window_params = [{transform_indices = @transform_0, window_bounds = array<i64: 8, 128>}, {pipeline_mode = #tpu.pipeline_mode<synchronous>, transform_indices = @transform_1, window_bounds = array<i64: 8, 128>}, {transform_indices = @transform_2, window_bounds = array<i64: 8, 1>}, {pipeline_mode = #tpu.pipeline_mode<synchronous>, transform_indices = @transform_3, window_bounds = array<i64: 1, 8>}, {transform_indices = @transform_4, window_bounds = array<i64: 8, 1>}]} {
    %c0 = arith.constant 0 : index
    %c0_0 = arith.constant 0 : index
    %0 = vector.load %arg1[%c0, %c0_0] : memref<8x128xf32, #tpu.memory_space<vmem>>, vector<8x128xf32>
    %c0_1 = arith.constant 0 : index
    %c0_2 = arith.constant 0 : index
    %1 = vector.load %arg2[%c0_1, %c0_2] : memref<8x128xf32, #tpu.memory_space<vmem>>, vector<8x128xf32>
    %c0_3 = arith.constant 0 : index
    %c0_4 = arith.constant 0 : index
    %2 = vector.load %arg3[%c0_3, %c0_4] : memref<8x1xi32, #tpu.memory_space<vmem>>, vector<8x1xi32>
    %c0_5 = arith.constant 0 : index
    %c0_6 = arith.constant 0 : index
    %3 = vector.load %arg4[%c0_5, %c0_6] : memref<1x8xi32, #tpu.memory_space<vmem>>, vector<1x8xi32>
    %4 = vector.broadcast %2 : vector<8x1xi32> to vector<8x8xi32>
    %5 = vector.broadcast %3 : vector<1x8xi32> to vector<8x8xi32>
    %6 = arith.cmpi eq, %4, %5 : vector<8x8xi32>
    %c0_i32 = arith.constant 0 : i32
    %7 = vector.broadcast %c0_i32 : i32 to vector<1x8xi32>
    %8 = arith.cmpi sge, %3, %7 : vector<1x8xi32>
    %9 = vector.broadcast %8 : vector<1x8xi1> to vector<8x8xi1>
    %10 = arith.andi %6, %9 : vector<8x8xi1>
    %cst = arith.constant dense<true> : vector<8x8xi1>
    %11 = arith.xori %6, %cst : vector<8x8xi1>
    %12 = vector.broadcast %8 : vector<1x8xi1> to vector<8x8xi1>
    %13 = arith.andi %11, %12 : vector<8x8xi1>
    %14 = arith.mulf %0, %0 : vector<8x128xf32>
    %cst_7 = arith.constant dense<0.000000e+00> : vector<8xf32>
    %15 = vector.multi_reduction <add>, %14, %cst_7 [1] : vector<8x128xf32> to vector<8xf32>
    %16 = vector.shape_cast %15 : vector<8xf32> to vector<8x1xf32>
    %cst_8 = arith.constant 1.000000e-24 : f32
    %17 = vector.broadcast %cst_8 : f32 to vector<8x1xf32>
    %18 = arith.maximumf %16, %17 : vector<8x1xf32>
    %19 = math.rsqrt %18 : vector<8x1xf32>
    %20 = vector.broadcast %19 : vector<8x1xf32> to vector<8x128xf32>
    %21 = arith.mulf %0, %20 : vector<8x128xf32>
    %22 = arith.mulf %1, %1 : vector<8x128xf32>
    %cst_9 = arith.constant dense<0.000000e+00> : vector<8xf32>
    %23 = vector.multi_reduction <add>, %22, %cst_9 [1] : vector<8x128xf32> to vector<8xf32>
    %24 = vector.shape_cast %23 : vector<8xf32> to vector<8x1xf32>
    %cst_10 = arith.constant 1.000000e-24 : f32
    %25 = vector.broadcast %cst_10 : f32 to vector<8x1xf32>
    %26 = arith.maximumf %24, %25 : vector<8x1xf32>
    %27 = math.rsqrt %26 : vector<8x1xf32>
    %28 = vector.broadcast %27 : vector<8x1xf32> to vector<8x128xf32>
    %29 = arith.mulf %1, %28 : vector<8x128xf32>
    %30 = arith.truncf %21 : vector<8x128xf32> to vector<8x128xbf16>
    %31 = arith.truncf %29 : vector<8x128xf32> to vector<8x128xbf16>
    %cst_11 = arith.constant dense<0.000000e+00> : vector<8x8xf32>
    %32 = tpu.matmul %30, %31, %cst_11 {dimension_numbers = #tpu.dot_dimension_numbers<[1], [1], [0], [0], [0, 0, 1, 0], [], []>} : vector<8x128xbf16>, vector<8x128xbf16>, vector<8x8xf32> -> vector<8x8xf32>
    %cst_12 = arith.constant 2.000000e+00 : f32
    %33 = vector.broadcast %cst_12 : f32 to vector<8x8xf32>
    %34 = arith.select %10, %32, %33 : vector<8x8xi1>, vector<8x8xf32>
    %cst_13 = arith.constant dense<0x7F800000> : vector<8xf32>
    %35 = vector.multi_reduction <minimumf>, %34, %cst_13 [1] : vector<8x8xf32> to vector<8xf32>
    %36 = vector.shape_cast %35 : vector<8xf32> to vector<8x1xf32>
    %cst_14 = arith.constant -2.000000e+00 : f32
    %37 = vector.broadcast %cst_14 : f32 to vector<8x8xf32>
    %38 = arith.select %13, %32, %37 : vector<8x8xi1>, vector<8x8xf32>
    %cst_15 = arith.constant dense<0xFF800000> : vector<8xf32>
    %39 = vector.multi_reduction <maximumf>, %38, %cst_15 [1] : vector<8x8xf32> to vector<8xf32>
    %40 = vector.shape_cast %39 : vector<8xf32> to vector<8x1xf32>
    %cst_16 = arith.constant 2.000000e+00 : f32
    %41 = vector.broadcast %cst_16 : f32 to vector<8x1xf32>
    %42 = arith.mulf %41, %36 : vector<8x1xf32>
    %cst_17 = arith.constant 2.000000e+00 : f32
    %43 = vector.broadcast %cst_17 : f32 to vector<8x1xf32>
    %44 = arith.subf %43, %42 : vector<8x1xf32>
    %cst_18 = arith.constant 2.000000e+00 : f32
    %45 = vector.broadcast %cst_18 : f32 to vector<8x1xf32>
    %46 = arith.mulf %45, %40 : vector<8x1xf32>
    %cst_19 = arith.constant 2.000000e+00 : f32
    %47 = vector.broadcast %cst_19 : f32 to vector<8x1xf32>
    %48 = arith.subf %47, %46 : vector<8x1xf32>
    %49 = arith.subf %44, %48 : vector<8x1xf32>
    %cst_20 = arith.constant 3.000000e-01 : f32
    %50 = vector.broadcast %cst_20 : f32 to vector<8x1xf32>
    %51 = arith.addf %49, %50 : vector<8x1xf32>
    %cst_21 = arith.constant 0.000000e+00 : f32
    %52 = vector.broadcast %cst_21 : f32 to vector<8x1xf32>
    %53 = arith.maximumf %51, %52 : vector<8x1xf32>
    %c0_i32_22 = arith.constant 0 : i32
    %54 = vector.broadcast %c0_i32_22 : i32 to vector<8x1xi32>
    %55 = arith.cmpi sge, %2, %54 : vector<8x1xi32>
    %cst_23 = arith.constant 0.000000e+00 : f32
    %56 = vector.broadcast %cst_23 : f32 to vector<8x1xf32>
    %57 = arith.select %55, %53, %56 : vector<8x1xi1>, vector<8x1xf32>
    %c0_24 = arith.constant 0 : index
    %c0_25 = arith.constant 0 : index
    %58 = vector.load %arg5[%c0_24, %c0_25] : memref<8x1xf32, #tpu.memory_space<vmem>>, vector<8x1xf32>
    tpu.vector_store %arg5[%c0_24, %c0_25], %57 {strides = array<i32>} : memref<8x1xf32, #tpu.memory_space<vmem>>, vector<8x1xf32>,
    return
  }
  func.func @transform_0(%arg0: i32) -> (i32, i32) {
    %c0_i32 = arith.constant 0 : i32
    %c0_i32_0 = arith.constant 0 : i32
    return %arg0, %c0_i32 : i32, i32
  }
  func.func @transform_1(%arg0: i32) -> (i32, i32) {
    %c0_i32 = arith.constant 0 : i32
    %c0_i32_0 = arith.constant 0 : i32
    %c0_i32_1 = arith.constant 0 : i32
    return %c0_i32, %c0_i32_0 : i32, i32
  }
  func.func @transform_2(%arg0: i32) -> (i32, i32) {
    %c0_i32 = arith.constant 0 : i32
    %c0_i32_0 = arith.constant 0 : i32
    return %arg0, %c0_i32 : i32, i32
  }
  func.func @transform_3(%arg0: i32) -> (i32, i32) {
    %c0_i32 = arith.constant 0 : i32
    %c0_i32_0 = arith.constant 0 : i32
    %c0_i32_1 = arith.constant 0 : i32
    return %c0_i32, %c0_i32_0 : i32, i32
  }
  func.func @transform_4(%arg0: i32) -> (i32, i32) {
    %c0_i32 = arith.constant 0 : i32
    %c0_i32_0 = arith.constant 0 : i32
    return %arg0, %c0_i32 : i32, i32
  }
}

</mosaic_0001>

<llo_original>
// kernel: tpu_custom_call.1
$region0: #{tpu_custom_call.1}
  #allocation0 [shape = 'u32[]', space=smem, size = 0x4, offset = 0x4, fixed_abs, tag = 'smem constant byte address 0x4 - core index']
  #allocation1 [shape = 'u32[72,128]{1,0:T(1,128)}', space=vmem, size = 0x9000, scoped, tag = 'internal scratch']
  %s0 = inlined_call_operand.vmem [shape: f32[8,128], index: 0, kind: input, shape index: {}]
  %s1 = inlined_call_operand.hbm [shape: f32[8,128], index: 1, kind: input, shape index: {}]
  %s2 = inlined_call_operand.vmem [shape: s32[8,1], index: 2, kind: input, shape index: {}]
  %s3 = inlined_call_operand.vmem [shape: s32[1,8], index: 3, kind: input, shape index: {}]
  %s4 = inlined_call_operand.vmem [shape: f32[8,1], index: 4, kind: output, shape index: {}]
  %s5 = sld [smem:[#allocation0]]
  $region30: #{tpu_custom_call.1} parent=0
    _
  %s7 = ssub.s32 1, %s5
  %s8 = scalar_select 0, %s7, %s5
  $region1: #{tpu_custom_call.1} parent=0
    #allocation2 [shape = 'u8[4096]{0}', space=vmem, size = 0x1000, scoped, tag = 'input window, operand 1, single buffered']
    #allocation3 [shape = 's32[1]{0}', space=sflag, size = 0x4, scoped, tag = 'scoped memory for tpu_custom_call.1']
    %9 = vsyncpa [#allocation3], 0
    // Predicated region
    $region2: #{tpu_custom_call.1} parent=1 // pred_check
      _
    $region3: #{tpu_custom_call.1} parent=1 // pred_check_branch
      %11 = sbr.rel (0) target = $region5
    $region4: #{tpu_custom_call.1} parent=1 // pred_region
      _
    $region5: #{tpu_custom_call.1} parent=1 // pred_fallthru
      _
    // Predicated region
    $region6: #{tpu_custom_call.1} parent=1 // pred_check
      _
    $region7: #{tpu_custom_call.1} parent=1 // pred_check_branch
      %13 = sbr.rel (0) target = $region9
    $region8: #{tpu_custom_call.1} parent=1 // pred_region
      %15 = vsyncadd [#allocation3], 0
      %s17 = sshll.u32 %s1, 4
      %s18 = int_to_ptr.hbm [resolvable:$true] %s17
      %s19 = sshll.u32 [#allocation2], 4
      %s20 = int_to_ptr.vmem [resolvable:$true] %s19
      %22 = dma.hbm_to_vmem [thread:$0]  %s18, 128, %s20, [#allocation3]
    $region9: #{tpu_custom_call.1} parent=1 // pred_fallthru
      _
    // Predicated region
    $region10: #{tpu_custom_call.1} parent=1 // pred_check
      _
    $region11: #{tpu_custom_call.1} parent=1 // pred_check_branch
      %24 = sbr.rel (0) target = $region13
    $region12: #{tpu_custom_call.1} parent=1 // pred_region
      _
    $region13: #{tpu_custom_call.1} parent=1 // pred_fallthru
      _
    // Predicated region
    $region14: #{tpu_custom_call.1} parent=1 // pred_check
      _
    $region15: #{tpu_custom_call.1} parent=1 // pred_check_branch
      %26 = sbr.rel (0) target = $region17
    $region16: #{tpu_custom_call.1} parent=1 // pred_region
      _
    $region17: #{tpu_custom_call.1} parent=1 // pred_fallthru
      _
    // Predicated region
    $region18: #{tpu_custom_call.1} parent=1 // pred_check
      _
    $region19: #{tpu_custom_call.1} parent=1 // pred_check_branch
      %28 = sbr.rel (0) target = $region21
    $region20: #{tpu_custom_call.1} parent=1 // pred_region
      %30 = dma.done [#allocation3], 128
    $region21: #{tpu_custom_call.1} parent=1 // pred_fallthru
      _
    %v32 = vld [vmem:[%s0] sm:$0xff]
    %v33 = vld [vmem:[#allocation2] sm:$0xff]
    %v34 = vld [vmem:[%s2] sm:$0xff]
    %v35 = vld [vmem:[%s3] sm:$0x1]
    %36 = vset.pattern.permute.xlu0 0
    %37 = vperm.xlu0 %36, %v34
    %v38 = vpop.permute.xlu0 %37
    %v39 = vperm.slane %v35, 0
    %vm40 = vcmp.eq.s32.totalorder %v38, %v39
    %vm41 = vcmp.ge.s32.totalorder %v35, 0
    %v42 = vsel %vm41, 1, 0
    %v43 = vperm.slane %v42, 0
    %vm44 = vcmp.eq.s32.totalorder %v43, 1
    %vm45 = vmand %vm40, %vm44
    %vm46 = vmxor %vm40, 1
    %vm47 = vmand %vm46, %vm44
    %v48 = vmul.f32 %v32, %v32
    %49 = vadd.xlane.f32.xlu0 %v48
    %v50 = vpop.xlane.xlu0 %49
    %v51 = vmax.f32 %v50, 1e-24
    %v52 = vrsqrt.pop %v51
    %v53 = vmul.f32 %v52, %v51
    %v54 = vmul.f32 %v53, %v52
    %v55 = vmul.f32 0.5, %v54
    %v56 = vsub.f32 1.5, %v55
    %v57 = vmul.f32 %v52, %v56
    %vm58 = vweird.f32 %v51
    %vm59 = vweird.f32 %v52
    %vm60 = vmor %vm58, %vm59
    %v61 = vsel %vm60, %v52, %v57
    %v62 = vmul.f32 %v32, %v61
    %v63 = vmul.f32 %v33, %v33
    %64 = vadd.xlane.f32.xlu0 %v63
    %v65 = vpop.xlane.xlu0 %64
    %v66 = vmax.f32 %v65, 1e-24
    %v67 = vrsqrt.pop %v66
    %v68 = vmul.f32 %v67, %v66
    %v69 = vmul.f32 %v68, %v67
    %v70 = vmul.f32 0.5, %v69
    %v71 = vsub.f32 1.5, %v70
    %v72 = vmul.f32 %v67, %v71
    %vm73 = vweird.f32 %v66
    %vm74 = vweird.f32 %v67
    %vm75 = vmor %vm73, %vm74
    %v76 = vsel %vm75, %v67, %v72
    %v77 = vmul.f32 %v33, %v76
    %v78 = vpack.c.bf16 %v62, %v62
    %v79 = vpack.c.bf16 %v77, %v77
    %80 = vmatpush.bf16.xpose.msra.mxu0 0
    %81 = vmatpush.bf16.xpose.msra.mxu0 0
    %82 = vmatpush.bf16.xpose.msra.mxu0 0
    %83 = vmatpush.bf16.xpose.msra.mxu0 0
    %84 = vmatpush.bf16.xpose.msra.mxu0 0
    %85 = vmatpush.bf16.xpose.msra.mxu0 0
    %86 = vmatpush.bf16.xpose.msra.mxu0 0
    %87 = vmatpush.bf16.xpose.msra.mxu0 %v79
    %88 = vmatmul.bf16.gmra.mxu0 %v78
    %v89 = vpop.f32.mrf.mxu0
    %v90 = vadd.f32 0.0, %v89
    %v91 = vpop.f32.mrf.mxu0
    %92 = vdwg.mxu0
    %v93 = vsel %vm45, %v90, 2.0
    %vm94 = vcmask 64512
    %v95 = vsel %vm94, %v93, inf
    %96 = vmin.xlane.f32.xlu0 %v95
    %v97 = vpop.xlane.xlu0 %96
    %v98 = vsel %vm47, %v90, -2.0
    %v99 = vsel %vm94, %v98, -inf
    %100 = vmax.xlane.f32.xlu0 %v99
    %v101 = vpop.xlane.xlu0 %100
    %v102 = vmul.f32 %v97, 2.0
    %v103 = vsub.f32 2.0, %v102
    %v104 = vmul.f32 %v101, 2.0
    %v105 = vsub.f32 2.0, %v104
    %v106 = vsub.f32 %v103, %v105
    %v107 = vadd.f32 %v106, 0.3
    %v108 = vmax.f32 %v107, 0.0
    %vm109 = vcmp.ge.s32.totalorder %v34, 0
    %v110 = vsel %vm109, %v108, 0.0
    %vm111 = vcmask 7168
    %112 = vst.msk [vmem:[%s4] sm:$0xff] %vm111, %v110
    // Predicated region
    $region22: #{tpu_custom_call.1} parent=1 // pred_check
      _
    $region23: #{tpu_custom_call.1} parent=1 // pred_check_branch
      %114 = sbr.rel (0) target = $region25
    $region24: #{tpu_custom_call.1} parent=1 // pred_region
      _
    $region25: #{tpu_custom_call.1} parent=1 // pred_fallthru
      _
    // Predicated region
    $region26: #{tpu_custom_call.1} parent=1 // pred_check
      _
    $region27: #{tpu_custom_call.1} parent=1 // pred_check_branch
      %116 = sbr.rel (0) target = $region29
    $region28: #{tpu_custom_call.1} parent=1 // pred_region
      _
    $region29: #{tpu_custom_call.1} parent=1 // pred_fallthru
      _
    %117 = vsyncpa [#allocation3], 1

</llo_original>
